<compile_context>
chip_gen: v6e
topology: v6e:2x2x1
jax: 0.10.0
libtpu: 0.0.40
codegen_flags: <defaults>
</compile_context>

<pallas_src>
import jax
import jax.numpy as jnp
from jax.experimental import pallas as pl
from jax.experimental.pallas import tpu as pltpu

IN_DIM = 28 * 28   # 784  (last dim uses the full-array block -> no 128 rule)
H1 = 128
H2 = 64
OUT_DIM = 10

H2_PAD = 128       # pad hidden-2 to a full lane width
OUT_PAD = 128      # pad logits to a full lane width (lane-dense output store)
NEG_PAD = -1e30    # bias for padded logit lanes: exp(NEG_PAD - m) == 0 exactly


def _round_up(n, m):
    return ((n + m - 1) // m) * m


def mlp_logsoftmax_kernel(x_ref, w1_ref, b1_ref, w2_ref, b2_ref,
                          w3_ref, b3_ref, o_ref):
    """Fused: 3 bf16 matmuls (f32 acc) + bias + ReLU + ReLU + log-softmax."""
    # x arrives as f32 straight from HBM (single pass); cast to bf16 on the
    # VPU right before the MXU — free when the kernel is memory-bound.
    x = x_ref[...].astype(jnp.bfloat16)                        # (TB, 784)

    h1 = jnp.dot(x, w1_ref[...], preferred_element_type=jnp.float32)
    h1 = jnp.maximum(h1 + b1_ref[...], 0.0)                    # (TB, 128) f32

    h2 = jnp.dot(h1.astype(jnp.bfloat16), w2_ref[...],
                 preferred_element_type=jnp.float32)
    h2 = jnp.maximum(h2 + b2_ref[...], 0.0)                    # (TB, 128); cols>=64 are 0

    logits = jnp.dot(h2.astype(jnp.bfloat16), w3_ref[...],
                     preferred_element_type=jnp.float32)
    logits = logits + b3_ref[...]                              # (TB, 128); pad lanes ~= -1e30

    # LogSoftmax(dim=1), numerically stable; padded lanes contribute exactly 0.
    m = jnp.max(logits, axis=-1, keepdims=True)
    shifted = logits - m
    lse = jnp.log(jnp.sum(jnp.exp(shifted), axis=-1, keepdims=True))
    o_ref[...] = (shifted - lse).astype(o_ref.dtype)


def _pad_params_for_kernel(params):
    """Zero-pad H2->128 and OUT->128; matmul weights in bf16, biases in f32."""
    w1, b1, w2, b2, w3, b3 = params
    w2p = jnp.zeros((H1, H2_PAD), jnp.float32).at[:, :H2].set(w2)
    b2p = jnp.zeros((1, H2_PAD), jnp.float32).at[:, :H2].set(b2)
    w3p = jnp.zeros((H2_PAD, OUT_PAD), jnp.float32).at[:H2, :OUT_DIM].set(w3)
    b3p = jnp.full((1, OUT_PAD), NEG_PAD, jnp.float32).at[:, :OUT_DIM].set(b3)
    return (w1.astype(jnp.bfloat16), b1.astype(jnp.float32),
            w2p.astype(jnp.bfloat16), b2p,
            w3p.astype(jnp.bfloat16), b3p)


def _choose_tb(B, tb):
    """Batch tile: multiple of 8 (f32 sublane packing), large enough to
    amortize the ~0.35 us per-step overhead (512-2048 rows), small enough to
    keep >= 2 grid steps for large batches (v7x dual TensorCore)."""
    if tb is None:
        tb = max(512, min(2048, _round_up(pl.cdiv(B, 8), 8)))
    tb = max(8, min(_round_up(tb, 8), _round_up(B, 8)))
    return tb


def _vmem_limit_bytes(tb):
    """Explicit scoped-VMEM limit: double-buffered x/out tiles + resident
    weights + headroom, capped safely below v7x's 64 MiB physical VMEM."""
    x_tile = tb * IN_DIM * 4                      # f32 x tile
    out_tile = tb * OUT_PAD * 4                   # f32 output tile
    weights = ((IN_DIM * H1 + H1 * H2_PAD + H2_PAD * OUT_PAD) * 2
               + (H1 + H2_PAD + OUT_PAD) * 4)
    needed = 2 * (x_tile + out_tile) + weights
    return int(min(max(needed + (8 << 20), 32 << 20), 56 << 20))


def ann_classifier_forward(x_nchw, params, *, tb=None):
    """x_nchw: (B, 1, 28, 28) float32 -> (B, 10) log-probabilities (float32)."""
    B = x_nchw.shape[0]
    tb = _choose_tb(B, tb)
    grid = (pl.cdiv(B, tb),)

    # nn.Flatten only — no dtype cast and no padding pass in the wrapper.
    x = x_nchw.reshape(B, -1)

    w1, b1, w2p, b2p, w3p, b3p = _pad_params_for_kernel(params)

    flops = 2 * B * (IN_DIM * H1 + H1 * H2_PAD + H2_PAD * OUT_PAD)
    transcendentals = B * (OUT_PAD + 1)
    bytes_accessed = (B * IN_DIM * 4                              # x (f32)
                      + (IN_DIM * H1 + H1 * H2_PAD + H2_PAD * OUT_PAD) * 2
                      + (H1 + H2_PAD + OUT_PAD) * 4               # biases (f32)
                      + B * OUT_PAD * 4)                          # output (f32)

    out = pl.pallas_call(
        mlp_logsoftmax_kernel,
        out_shape=jax.ShapeDtypeStruct((B, OUT_PAD), jnp.float32),
        grid_spec=pltpu.PrefetchScalarGridSpec(
            num_scalar_prefetch=0,
            grid=grid,
            in_specs=[
                pl.BlockSpec((tb, IN_DIM), lambda i: (i, 0)),       # x tile (pipelined, ragged tail OK)
                pl.BlockSpec((IN_DIM, H1), lambda i: (0, 0)),       # w1 (VMEM-resident)
                pl.BlockSpec((1, H1), lambda i: (0, 0)),            # b1
                pl.BlockSpec((H1, H2_PAD), lambda i: (0, 0)),       # w2 (padded)
                pl.BlockSpec((1, H2_PAD), lambda i: (0, 0)),        # b2 (padded)
                pl.BlockSpec((H2_PAD, OUT_PAD), lambda i: (0, 0)),  # w3 (padded)
                pl.BlockSpec((1, OUT_PAD), lambda i: (0, 0)),       # b3 (padded, -1e30 lanes)
            ],
            out_specs=pl.BlockSpec((tb, OUT_PAD), lambda i: (i, 0)),
        ),
        compiler_params=pltpu.CompilerParams(
            dimension_semantics=("parallel",),
            vmem_limit_bytes=_vmem_limit_bytes(tb)),
        cost_estimate=pl.CostEstimate(flops=flops,
                                      transcendentals=transcendentals,
                                      bytes_accessed=bytes_accessed),
    )(x, w1, b1, w2p, b2p, w3p, b3p)

    # Only the lane padding needs slicing; batch is exact (OOB rows masked).
    return out[:, :OUT_DIM]


def init_params(key):
    """Deterministic init mimicking torch.nn.Linear default U(-1/sqrt(fan_in), +)."""
    ks = jax.random.split(key, 6)

    def linear(kw, kb, fan_in, fan_out):
        bound = 1.0 / jnp.sqrt(fan_in)
        w = jax.random.uniform(kw, (fan_in, fan_out), jnp.float32, -bound, bound)
        b = jax.random.uniform(kb, (1, fan_out), jnp.float32, -bound, bound)
        return w, b

    w1, b1 = linear(ks[0], ks[1], IN_DIM, H1)
    w2, b2 = linear(ks[2], ks[3], H1, H2)
    w3, b3 = linear(ks[4], ks[5], H2, OUT_DIM)
    return (w1, b1, w2, b2, w3, b3)


def reference_forward_f32(x_nchw, params):
    """Pure-JAX f32 reference (original module semantics)."""
    w1, b1, w2, b2, w3, b3 = params
    x = x_nchw.reshape(x_nchw.shape[0], -1)
    h1 = jnp.maximum(x @ w1 + b1, 0.0)
    h2 = jnp.maximum(h1 @ w2 + b2, 0.0)
    logits = h2 @ w3 + b3
    return jax.nn.log_softmax(logits, axis=1)


def reference_forward_bf16(x_nchw, params):
    """Pure-JAX reference with the same bf16-matmul / f32-elementwise recipe."""
    w1, b1, w2, b2, w3, b3 = params
    bf16 = jnp.bfloat16
    x = x_nchw.reshape(x_nchw.shape[0], -1).astype(bf16)
    h1 = jnp.maximum(
        jnp.dot(x, w1.astype(bf16), preferred_element_type=jnp.float32) + b1, 0.0)
    h2 = jnp.maximum(
        jnp.dot(h1.astype(bf16), w2.astype(bf16),
                preferred_element_type=jnp.float32) + b2, 0.0)
    logits = jnp.dot(h2.astype(bf16), w3.astype(bf16),
                     preferred_element_type=jnp.float32) + b3
    return jax.nn.log_softmax(logits, axis=1)


if __name__ == "__main__":
    key = jax.random.PRNGKey(0)
    k_x, k_p = jax.random.split(key)

    # Small demo shapes: B=40 with tb=16 exercises a multi-step grid of 3 tiles
    # including the ragged (un-padded) final tile path.
    B = 40
    x = jax.random.normal(k_x, (B, 1, 28, 28), dtype=jnp.float32)  # NCHW, MNIST-like
    params = init_params(k_p)

    out = ann_classifier_forward(x, params, tb=16)
    out = jax.block_until_ready(out)
    assert out.shape == (B, OUT_DIM)
    assert bool(jnp.all(jnp.isfinite(out)))

    # Tight check against a reference using the identical bf16-matmul recipe.
    ref_bf16 = reference_forward_bf16(x, params)
    assert jnp.allclose(out, ref_bf16, atol=1e-3, rtol=1e-3), \
        "mismatch vs bf16-matched reference"

    # Loose check against the original f32 module semantics.
    ref_f32 = reference_forward_f32(x, params)
    assert jnp.allclose(out, ref_f32, atol=5e-2, rtol=5e-2), \
        "mismatch vs f32 reference"

    print("KERNEL_OK")
</pallas_src>

<mosaic_0001>
module attributes {stable_mosaic.version = 11 : i64} {
  func.func @mlp_logsoftmax_kernel(%arg0: i32, %arg1: memref<16x784xf32, #tpu.memory_space<vmem>>, %arg2: memref<784x128xbf16, #tpu.memory_space<vmem>>, %arg3: memref<1x128xf32, #tpu.memory_space<vmem>>, %arg4: memref<128x128xbf16, #tpu.memory_space<vmem>>, %arg5: memref<1x128xf32, #tpu.memory_space<vmem>>, %arg6: memref<128x128xbf16, #tpu.memory_space<vmem>>, %arg7: memref<1x128xf32, #tpu.memory_space<vmem>>, %arg8: memref<16x128xf32, #tpu.memory_space<vmem>>) attributes {dimension_semantics = [#tpu.dimension_semantics<parallel>], iteration_bounds = array<i64: 3>, scalar_prefetch = 0 : i64, scratch_operands = 0 : i64, tpu.core_type = #tpu.core_type<tc>, window_params = [{transform_indices = @transform_0, window_bounds = array<i64: 16, 784>}, {pipeline_mode = #tpu.pipeline_mode<synchronous>, transform_indices = @transform_1, window_bounds = array<i64: 784, 128>}, {pipeline_mode = #tpu.pipeline_mode<synchronous>, transform_indices = @transform_2, window_bounds = array<i64: 1, 128>}, {pipeline_mode = #tpu.pipeline_mode<synchronous>, transform_indices = @transform_3, window_bounds = array<i64: 128, 128>}, {pipeline_mode = #tpu.pipeline_mode<synchronous>, transform_indices = @transform_4, window_bounds = array<i64: 1, 128>}, {pipeline_mode = #tpu.pipeline_mode<synchronous>, transform_indices = @transform_5, window_bounds = array<i64: 128, 128>}, {pipeline_mode = #tpu.pipeline_mode<synchronous>, transform_indices = @transform_6, window_bounds = array<i64: 1, 128>}, {transform_indices = @transform_7, window_bounds = array<i64: 16, 128>}]} {
    %c0 = arith.constant 0 : index
    %c0_0 = arith.constant 0 : index
    %0 = vector.load %arg1[%c0, %c0_0] : memref<16x784xf32, #tpu.memory_space<vmem>>, vector<16x784xf32>
    %1 = arith.truncf %0 : vector<16x784xf32> to vector<16x784xbf16>
    %c0_1 = arith.constant 0 : index
    %c0_2 = arith.constant 0 : index
    %2 = vector.load %arg2[%c0_1, %c0_2] : memref<784x128xbf16, #tpu.memory_space<vmem>>, vector<784x128xbf16>
    %cst = arith.constant dense<0.000000e+00> : vector<16x128xf32>
    %3 = tpu.matmul %1, %2, %cst {dimension_numbers = #tpu.dot_dimension_numbers<[1], [0], [0], [1], [0, 0, 1, 1], [], []>} : vector<16x784xbf16>, vector<784x128xbf16>, vector<16x128xf32> -> vector<16x128xf32>
    %c0_3 = arith.constant 0 : index
    %c0_4 = arith.constant 0 : index
    %4 = vector.load %arg3[%c0_3, %c0_4] : memref<1x128xf32, #tpu.memory_space<vmem>>, vector<1x128xf32>
    %5 = vector.broadcast %4 : vector<1x128xf32> to vector<16x128xf32>
    %6 = arith.addf %3, %5 : vector<16x128xf32>
    %cst_5 = arith.constant 0.000000e+00 : f32
    %7 = vector.broadcast %cst_5 : f32 to vector<16x128xf32>
    %8 = arith.maximumf %6, %7 : vector<16x128xf32>
    %9 = arith.truncf %8 : vector<16x128xf32> to vector<16x128xbf16>
    %c0_6 = arith.constant 0 : index
    %c0_7 = arith.constant 0 : index
    %10 = vector.load %arg4[%c0_6, %c0_7] : memref<128x128xbf16, #tpu.memory_space<vmem>>, vector<128x128xbf16>
    %cst_8 = arith.constant dense<0.000000e+00> : vector<16x128xf32>
    %11 = tpu.matmul %9, %10, %cst_8 {dimension_numbers = #tpu.dot_dimension_numbers<[1], [0], [0], [1], [0, 0, 1, 1], [], []>} : vector<16x128xbf16>, vector<128x128xbf16>, vector<16x128xf32> -> vector<16x128xf32>
    %c0_9 = arith.constant 0 : index
    %c0_10 = arith.constant 0 : index
    %12 = vector.load %arg5[%c0_9, %c0_10] : memref<1x128xf32, #tpu.memory_space<vmem>>, vector<1x128xf32>
    %13 = vector.broadcast %12 : vector<1x128xf32> to vector<16x128xf32>
    %14 = arith.addf %11, %13 : vector<16x128xf32>
    %cst_11 = arith.constant 0.000000e+00 : f32
    %15 = vector.broadcast %cst_11 : f32 to vector<16x128xf32>
    %16 = arith.maximumf %14, %15 : vector<16x128xf32>
    %17 = arith.truncf %16 : vector<16x128xf32> to vector<16x128xbf16>
    %c0_12 = arith.constant 0 : index
    %c0_13 = arith.constant 0 : index
    %18 = vector.load %arg6[%c0_12, %c0_13] : memref<128x128xbf16, #tpu.memory_space<vmem>>, vector<128x128xbf16>
    %cst_14 = arith.constant dense<0.000000e+00> : vector<16x128xf32>
    %19 = tpu.matmul %17, %18, %cst_14 {dimension_numbers = #tpu.dot_dimension_numbers<[1], [0], [0], [1], [0, 0, 1, 1], [], []>} : vector<16x128xbf16>, vector<128x128xbf16>, vector<16x128xf32> -> vector<16x128xf32>
    %c0_15 = arith.constant 0 : index
    %c0_16 = arith.constant 0 : index
    %20 = vector.load %arg7[%c0_15, %c0_16] : memref<1x128xf32, #tpu.memory_space<vmem>>, vector<1x128xf32>
    %21 = vector.broadcast %20 : vector<1x128xf32> to vector<16x128xf32>
    %22 = arith.addf %19, %21 : vector<16x128xf32>
    %cst_17 = arith.constant dense<0xFF800000> : vector<16xf32>
    %23 = vector.multi_reduction <maximumf>, %22, %cst_17 [1] : vector<16x128xf32> to vector<16xf32>
    %24 = vector.shape_cast %23 : vector<16xf32> to vector<16x1xf32>
    %25 = vector.broadcast %24 : vector<16x1xf32> to vector<16x128xf32>
    %26 = arith.subf %22, %25 : vector<16x128xf32>
    %27 = math.exp %26 : vector<16x128xf32>
    %cst_18 = arith.constant dense<0.000000e+00> : vector<16xf32>
    %28 = vector.multi_reduction <add>, %27, %cst_18 [1] : vector<16x128xf32> to vector<16xf32>
    %29 = vector.shape_cast %28 : vector<16xf32> to vector<16x1xf32>
    %30 = math.log %29 : vector<16x1xf32>
    %31 = vector.broadcast %30 : vector<16x1xf32> to vector<16x128xf32>
    %32 = arith.subf %26, %31 : vector<16x128xf32>
    %c0_19 = arith.constant 0 : index
    %c0_20 = arith.constant 0 : index
    %33 = vector.load %arg8[%c0_19, %c0_20] : memref<16x128xf32, #tpu.memory_space<vmem>>, vector<16x128xf32>
    tpu.vector_store %arg8[%c0_19, %c0_20], %32 {strides = array<i32>} : memref<16x128xf32, #tpu.memory_space<vmem>>, vector<16x128xf32>,
    return
  }
  func.func @transform_0(%arg0: i32) -> (i32, i32) {
    %c0_i32 = arith.constant 0 : i32
    %c0_i32_0 = arith.constant 0 : i32
    return %arg0, %c0_i32 : i32, i32
  }
  func.func @transform_1(%arg0: i32) -> (i32, i32) {
    %c0_i32 = arith.constant 0 : i32
    %c0_i32_0 = arith.constant 0 : i32
    %c0_i32_1 = arith.constant 0 : i32
    return %c0_i32, %c0_i32_0 : i32, i32
  }
  func.func @transform_2(%arg0: i32) -> (i32, i32) {
    %c0_i32 = arith.constant 0 : i32
    %c0_i32_0 = arith.constant 0 : i32
    %c0_i32_1 = arith.constant 0 : i32
    return %c0_i32, %c0_i32_0 : i32, i32
  }
  func.func @transform_3(%arg0: i32) -> (i32, i32) {
    %c0_i32 = arith.constant 0 : i32
    %c0_i32_0 = arith.constant 0 : i32
    %c0_i32_1 = arith.constant 0 : i32
    return %c0_i32, %c0_i32_0 : i32, i32
  }
  func.func @transform_4(%arg0: i32) -> (i32, i32) {
    %c0_i32 = arith.constant 0 : i32
    %c0_i32_0 = arith.constant 0 : i32
    %c0_i32_1 = arith.constant 0 : i32
    return %c0_i32, %c0_i32_0 : i32, i32
  }
  func.func @transform_5(%arg0: i32) -> (i32, i32) {
    %c0_i32 = arith.constant 0 : i32
    %c0_i32_0 = arith.constant 0 : i32
    %c0_i32_1 = arith.constant 0 : i32
    return %c0_i32, %c0_i32_0 : i32, i32
  }
  func.func @transform_6(%arg0: i32) -> (i32, i32) {
    %c0_i32 = arith.constant 0 : i32
    %c0_i32_0 = arith.constant 0 : i32
    %c0_i32_1 = arith.constant 0 : i32
    return %c0_i32, %c0_i32_0 : i32, i32
  }
  func.func @transform_7(%arg0: i32) -> (i32, i32) {
    %c0_i32 = arith.constant 0 : i32
    %c0_i32_0 = arith.constant 0 : i32
    return %arg0, %c0_i32 : i32, i32
  }
}

</mosaic_0001>

<llo_original>
// kernel: tpu_custom_call.1
$region0: #{tpu_custom_call.1}
  #allocation0 [shape = 'u32[]', space=smem, size = 0x4, offset = 0x4, fixed_abs, tag = 'smem constant byte address 0x4 - core index']
  #allocation1 [shape = 'u32[144,128]{1,0:T(1,128)}', space=vmem, size = 0x12000, scoped, tag = 'internal scratch']
  %s0 = inlined_call_operand.hbm [shape: f32[40,784], index: 0, kind: input, shape index: {}]
  %s1 = inlined_call_operand.hbm [shape: bf16[784,128], index: 1, kind: input, shape index: {}]
  %s2 = inlined_call_operand.vmem [shape: f32[1,128], index: 2, kind: input, shape index: {}]
  %s3 = inlined_call_operand.hbm [shape: bf16[128,128], index: 3, kind: input, shape index: {}]
  %s4 = inlined_call_operand.vmem [shape: f32[1,128], index: 4, kind: input, shape index: {}]
  %s5 = inlined_call_operand.hbm [shape: bf16[128,128], index: 5, kind: input, shape index: {}]
  %s6 = inlined_call_operand.vmem [shape: f32[1,128], index: 6, kind: input, shape index: {}]
  %s7 = inlined_call_operand.hbm [shape: f32[40,128], index: 7, kind: output, shape index: {}]
  %s8 = sld [smem:[#allocation0]]
  $region77: #{tpu_custom_call.1} parent=0
    _
  %s10 = ssub.s32 1, %s8
  %s11 = scalar_select 0, %s10, %s8
  $region1: #{tpu_custom_call.1} parent=0
    #allocation2 [shape = 'u8[114688]{0}', space=vmem, size = 0x1c000, scoped, tag = 'input window, operand 0']
    #allocation3 [shape = 's32[2]{0}', space=sflag, size = 0x8, scoped, tag = 'scoped memory for tpu_custom_call.1']
    #allocation4 [shape = 's32[2]{0}', space=sflag, size = 0x8, scoped, tag = 'scoped memory for tpu_custom_call.1']
    #allocation5 [shape = 'u8[200704]{0}', space=vmem, size = 0x31000, scoped, tag = 'input window, operand 1, single buffered']
    #allocation6 [shape = 's32[1]{0}', space=sflag, size = 0x4, scoped, tag = 'scoped memory for tpu_custom_call.1']
    #allocation7 [shape = 'u8[32768]{0}', space=vmem, size = 0x8000, scoped, tag = 'input window, operand 3, single buffered']
    #allocation8 [shape = 'u8[32768]{0}', space=vmem, size = 0x8000, scoped, tag = 'input window, operand 5, single buffered']
    #allocation9 [shape = 's32[1]{0}', space=sflag, size = 0x4, scoped, tag = 'scoped memory for tpu_custom_call.1']
    #allocation10 [shape = 'u8[16384]{0}', space=vmem, size = 0x4000, scoped, tag = 'output window, operand 0']
    %12 = vsyncpa [#allocation3], 0
    %s13 = scalar_lea.sflag [#allocation3], 1
    %14 = vsyncpa %s13, 0
    %15 = vsyncpa [#allocation6], 0
    %16 = vsyncpa [#allocation9], 0
    %17 = vsyncpa [#allocation4], 0
    %s18 = scalar_lea.sflag [#allocation4], 1
    %19 = vsyncpa %s18, 0
    loop: start=0, step=1, limit=5
    $region2: #{tpu_custom_call.1} parent=1 // loop_pre_header
      _
    $region3: #{tpu_custom_call.1} parent=1 // loop_header
      %s21 = sphi 0, %s25
      %p22 = scmp.ge.s32.totalorder %s21, 5
      %s31 = sphi 0, %s33
      %s34 = sphi 0, %s31
      %s35 = sphi 0, %s34
      %s51 = sphi 0, %s35
      %s55 = sphi 0, %s55
      %s57 = sphi 0, %s55
      %s58 = sphi 0, %s57
      %s72 = sphi 0, %s58
      %s76 = sphi 0, %s76
      %s78 = sphi 0, %s76
      %s79 = sphi 0, %s78
      %s93 = sphi 0, %s79
      %s97 = sphi 0, %s97
      %s99 = sphi 0, %s97
      %s100 = sphi 0, %s99
      %s114 = sphi 0, %s100
      %s118 = sphi 0, %s118
      %s120 = sphi 0, %s118
      %s121 = sphi 0, %s120
      %s135 = sphi 0, %s121
      %s139 = sphi 0, %s139
      %s141 = sphi 0, %s139
      %s142 = sphi 0, %s141
      %s156 = sphi 0, %s142
      %s160 = sphi 0, %s160
      %s162 = sphi 0, %s160
      %s163 = sphi 0, %s162
      %s177 = sphi 0, %s163
      %s183 = sphi 0, %s185
      %s186 = sphi 0, %s183
      %s187 = sphi 0, %s186
      %s203 = sphi 0, %s187
    $region4: #{tpu_custom_call.1} parent=1 // loop_header_branch
      %24 = sbr.rel (%p22) target = $region8
    $region5: #{tpu_custom_call.1} parent=1 // loop_body
      %s26 = ssub.s32 %s21, 1
      %s27 = ssub.s32 %s21, 2
      %s28 = sadd.s32 %s21, 1
      %s29 = ssub.s32 %s21, %s28
      %p30 = scmp.eq.s32.totalorder %s29, 0
      %s32 = sadd.s32 %s31, 1
      %s33 = scalar_select %p30, %s31, %s32
      %p36 = pneg %p30
      %p37 = scmp.eq.s32.totalorder %s21, 2
      %p38 = por %p36, %p37
      %p39 = scmp.ne.s32.totalorder %s31, %s34
      %p40 = scmp.eq.s32.totalorder %s21, 0
      %p41 = por %p39, %p40
      %p42 = scmp.ne.s32.totalorder %s31, %s34
      %p43 = scmp.eq.s32.totalorder %s26, 2
      %p44 = por %p42, %p43
      %p45 = scmp.ne.s32.totalorder %s34, %s35
      %p46 = scmp.eq.s32.totalorder %s26, 0
      %p47 = por %p45, %p46
      %p48 = scmp.ne.s32.totalorder %s34, %s35
      %p49 = scmp.eq.s32.totalorder %s27, 2
      %p50 = por %p48, %p49
      %p52 = scmp.ne.s32.totalorder %s35, %s51
      %p53 = scmp.eq.s32.totalorder %s27, 0
      %p54 = por %p52, %p53
      %s56 = sadd.s32 %s55, 1
      %p59 = scmp.eq.s32.totalorder %s21, 2
      %p60 = scmp.ne.s32.totalorder %s55, %s57
      %p61 = scmp.eq.s32.totalorder %s21, 0
      %p62 = por %p60, %p61
      %p63 = scmp.ne.s32.totalorder %s55, %s57
      %p64 = scmp.eq.s32.totalorder %s26, 2
      %p65 = por %p63, %p64
      %p66 = scmp.ne.s32.totalorder %s57, %s58
      %p67 = scmp.eq.s32.totalorder %s26, 0
      %p68 = por %p66, %p67
      %p69 = scmp.ne.s32.totalorder %s57, %s58
      %p70 = scmp.eq.s32.totalorder %s27, 2
      %p71 = por %p69, %p70
      %p73 = scmp.ne.s32.totalorder %s58, %s72
      %p74 = scmp.eq.s32.totalorder %s27, 0
      %p75 = por %p73, %p74
      %s77 = sadd.s32 %s76, 1
      %p80 = scmp.eq.s32.totalorder %s21, 2
      %p81 = scmp.ne.s32.totalorder %s76, %s78
      %p82 = scmp.eq.s32.totalorder %s21, 0
      %p83 = por %p81, %p82
      %p84 = scmp.ne.s32.totalorder %s76, %s78
      %p85 = scmp.eq.s32.totalorder %s26, 2
      %p86 = por %p84, %p85
      %p87 = scmp.ne.s32.totalorder %s78, %s79
      %p88 = scmp.eq.s32.totalorder %s26, 0
      %p89 = por %p87, %p88
      %p90 = scmp.ne.s32.totalorder %s78, %s79
      %p91 = scmp.eq.s32.totalorder %s27, 2
      %p92 = por %p90, %p91
      %p94 = scmp.ne.s32.totalorder %s79, %s93
      %p95 = scmp.eq.s32.totalorder %s27, 0
      %p96 = por %p94, %p95
      %s98 = sadd.s32 %s97, 1
      %p101 = scmp.eq.s32.totalorder %s21, 2
      %p102 = scmp.ne.s32.totalorder %s97, %s99
      %p103 = scmp.eq.s32.totalorder %s21, 0
      %p104 = por %p102, %p103
      %p105 = scmp.ne.s32.totalorder %s97, %s99
      %p106 = scmp.eq.s32.totalorder %s26, 2
      %p107 = por %p105, %p106
      %p108 = scmp.ne.s32.totalorder %s99, %s100
      %p109 = scmp.eq.s32.totalorder %s26, 0
      %p110 = por %p108, %p109
      %p111 = scmp.ne.s32.totalorder %s99, %s100
      %p112 = scmp.eq.s32.totalorder %s27, 2
      %p113 = por %p111, %p112
      %p115 = scmp.ne.s32.totalorder %s100, %s114
      %p116 = scmp.eq.s32.totalorder %s27, 0
      %p117 = por %p115, %p116
      %s119 = sadd.s32 %s118, 1
      %p122 = scmp.eq.s32.totalorder %s21, 2
      %p123 = scmp.ne.s32.totalorder %s118, %s120
      %p124 = scmp.eq.s32.totalorder %s21, 0
      %p125 = por %p123, %p124
      %p126 = scmp.ne.s32.totalorder %s118, %s120
      %p127 = scmp.eq.s32.totalorder %s26, 2
      %p128 = por %p126, %p127
      %p129 = scmp.ne.s32.totalorder %s120, %s121
      %p130 = scmp.eq.s32.totalorder %s26, 0
      %p131 = por %p129, %p130
      %p132 = scmp.ne.s32.totalorder %s120, %s121
      %p133 = scmp.eq.s32.totalorder %s27, 2
      %p134 = por %p132, %p133
      %p136 = scmp.ne.s32.totalorder %s121, %s135
      %p137 = scmp.eq.s32.totalorder %s27, 0
      %p138 = por %p136, %p137
      %s140 = sadd.s32 %s139, 1
      %p143 = scmp.eq.s32.totalorder %s21, 2
      %p144 = scmp.ne.s32.totalorder %s139, %s141
      %p145 = scmp.eq.s32.totalorder %s21, 0
      %p146 = por %p144, %p145
      %p147 = scmp.ne.s32.totalorder %s139, %s141
      %p148 = scmp.eq.s32.totalorder %s26, 2
      %p149 = por %p147, %p148
      %p150 = scmp.ne.s32.totalorder %s141, %s142
      %p151 = scmp.eq.s32.totalorder %s26, 0
      %p152 = por %p150, %p151
      %p153 = scmp.ne.s32.totalorder %s141, %s142
      %p154 = scmp.eq.s32.totalorder %s27, 2
      %p155 = por %p153, %p154
      %p157 = scmp.ne.s32.totalorder %s142, %s156
      %p158 = scmp.eq.s32.totalorder %s27, 0
      %p159 = por %p157, %p158
      %s161 = sadd.s32 %s160, 1
      %p164 = scmp.eq.s32.totalorder %s21, 2
      %p165 = scmp.ne.s32.totalorder %s160, %s162
      %p166 = scmp.eq.s32.totalorder %s21, 0
      %p167 = por %p165, %p166
      %p168 = scmp.ne.s32.totalorder %s160, %s162
      %p169 = scmp.eq.s32.totalorder %s26, 2
      %p170 = por %p168, %p169
      %p171 = scmp.ne.s32.totalorder %s162, %s163
      %p172 = scmp.eq.s32.totalorder %s26, 0
      %p173 = por %p171, %p172
      %p174 = scmp.ne.s32.totalorder %s162, %s163
      %p175 = scmp.eq.s32.totalorder %s27, 2
      %p176 = por %p174, %p175
      %p178 = scmp.ne.s32.totalorder %s163, %s177
      %p179 = scmp.eq.s32.totalorder %s27, 0
      %p180 = por %p178, %p179
      %s181 = ssub.s32 %s21, %s28
      %p182 = scmp.eq.s32.totalorder %s181, 0
      %s184 = sadd.s32 %s183, 1
      %s185 = scalar_select %p182, %s183, %s184
      %p188 = pneg %p182
      %p189 = scmp.eq.s32.totalorder %s21, 2
      %p190 = por %p188, %p189
      %p191 = scmp.ne.s32.totalorder %s183, %s186
      %p192 = scmp.eq.s32.totalorder %s21, 0
      %p193 = por %p191, %p192
      %p194 = scmp.ne.s32.totalorder %s183, %s186
      %p195 = scmp.eq.s32.totalorder %s26, 2
      %p196 = por %p194, %p195
      %p197 = scmp.ne.s32.totalorder %s186, %s187
      %p198 = scmp.eq.s32.totalorder %s26, 0
      %p199 = por %p197, %p198
      %p200 = scmp.ne.s32.totalorder %s186, %s187
      %p201 = scmp.eq.s32.totalorder %s27, 2
      %p202 = por %p200, %p201
      %p204 = scmp.ne.s32.totalorder %s187, %s203
      %p205 = scmp.eq.s32.totalorder %s27, 0
      %p206 = por %p204, %p205
      %p207 = scmp.le.s32.totalorder 1, %s21
      %p208 = scmp.lt.s32.totalorder %s21, 4
      %p209 = pnand %p207, %p208
      %p210 = pneg %p209
      // Predicated region
      $region9: #{tpu_custom_call.1} parent=5 // pred_check
        _
      $region10: #{tpu_custom_call.1} parent=5 // pred_check_branch
        %212 = sbr.rel (%p209) target = $region12
      $region11: #{tpu_custom_call.1} parent=5 // pred_region
        %s213 = ssub.s32 %s21, 1
        // Predicated region
        $region13: #{tpu_custom_call.1} parent=11 // pred_check
          %p214 = pneg %p68
        $region14: #{tpu_custom_call.1} parent=11 // pred_check_branch
          %216 = sbr.rel (%p214) target = $region16
        $region15: #{tpu_custom_call.1} parent=11 // pred_region
          %s218 = ssub.s32 6272, 6272
          %219 = vsyncadd [#allocation6], %s218
          %s220 = sshll.u32 [#allocation5], 4
          %s221 = int_to_ptr.vmem [resolvable:$true] %s220
          %226 = dma.hbm_to_vmem [thread:$0]  %s1, 6272, %s221, [#allocation6], 64, 64, 4
        $region16: #{tpu_custom_call.1} parent=11 // pred_fallthru
          _
        // Predicated region
        $region17: #{tpu_custom_call.1} parent=11 // pred_check
          %p227 = pneg %p89
        $region18: #{tpu_custom_call.1} parent=11 // pred_check_branch
          %229 = sbr.rel (%p227) target = $region20
        $region19: #{tpu_custom_call.1} parent=11 // pred_region
          _
        $region20: #{tpu_custom_call.1} parent=11 // pred_fallthru
          _
        // Predicated region
        $region21: #{tpu_custom_call.1} parent=11 // pred_check
          %p230 = pneg %p110
        $region22: #{tpu_custom_call.1} parent=11 // pred_check_branch
          %232 = sbr.rel (%p230) target = $region24
        $region23: #{tpu_custom_call.1} parent=11 // pred_region
          %s234 = ssub.s32 1024, 1024
          %235 = vsyncadd [#allocation6], %s234
          %s236 = sshll.u32 [#allocation7], 4
          %s237 = int_to_ptr.vmem [resolvable:$true] %s236
          %242 = dma.hbm_to_vmem [thread:$0]  %s3, 1024, %s237, [#allocation6], 64, 64, 4
        $region24: #{tpu_custom_call.1} parent=11 // pred_fallthru
          _
        // Predicated region
        $region25: #{tpu_custom_call.1} parent=11 // pred_check
          %p243 = pneg %p131
        $region26: #{tpu_custom_call.1} parent=11 // pred_check_branch
          %245 = sbr.rel (%p243) target = $region28
        $region27: #{tpu_custom_call.1} parent=11 // pred_region
          _
        $region28: #{tpu_custom_call.1} parent=11 // pred_fallthru
          _
        // Predicated region
        $region29: #{tpu_custom_call.1} parent=11 // pred_check
          %p246 = pneg %p152
        $region30: #{tpu_custom_call.1} parent=11 // pred_check_branch
          %248 = sbr.rel (%p246) target = $region32
        $region31: #{tpu_custom_call.1} parent=11 // pred_region
          %s250 = ssub.s32 1024, 1024
          %251 = vsyncadd [#allocation9], %s250
          %s252 = sshll.u32 [#allocation8], 4
          %s253 = int_to_ptr.vmem [resolvable:$true] %s252
          %258 = dma.hbm_to_vmem [thread:$0]  %s5, 1024, %s253, [#allocation9], 64, 64, 4
        $region32: #{tpu_custom_call.1} parent=11 // pred_fallthru
          _
        // Predicated region
        $region33: #{tpu_custom_call.1} parent=11 // pred_check
          %p259 = pneg %p173
        $region34: #{tpu_custom_call.1} parent=11 // pred_check_branch
          %261 = sbr.rel (%p259) target = $region36
        $region35: #{tpu_custom_call.1} parent=11 // pred_region
          _
        $region36: #{tpu_custom_call.1} parent=11 // pred_fallthru
          _
      $region12: #{tpu_custom_call.1} parent=5 // pred_fallthru
        _
      %p262 = scmp.lt.s32.totalorder %s21, 3
      // Predicated region
      $region37: #{tpu_custom_call.1} parent=5 // pred_check
        %p263 = pneg %p262
      $region38: #{tpu_custom_call.1} parent=5 // pred_check_branch
        %265 = sbr.rel (%p263) target = $region40
      $region39: #{tpu_custom_call.1} parent=5 // pred_region
        // Predicated region
        $region41: #{tpu_custom_call.1} parent=39 // pred_check
          %p266 = pneg %p41
        $region42: #{tpu_custom_call.1} parent=39 // pred_check_branch
          %268 = sbr.rel (%p266) target = $region44
        $region43: #{tpu_custom_call.1} parent=39 // pred_region
          %s269 = sand.u32 %s31, 1
          %s270 = scalar_lea.sflag [#allocation3], %s269
          %s271 = sand.u32 %s31, 1
          %s272 = smul.addr %s271, 112
          %s273 = scalar_lea.vmem [#allocation2], %s272
          %s274 = smul.u32 2, %s21
          %s275 = ssub.s32 5, %s274
          %p276 = scmp.lt.s32.totalorder %s275, 2
          %s277 = scalar_select %p276, %s275, 2
          %s278 = smul.u32 128, %s277
          %s279 = smul.u32 %s278, 7
          %s281 = ssub.s32 1792, %s279
          %282 = vsyncadd %s270, %s281
          %p283 = scmp.ne.s32.totalorder 0, %s279
          %s284 = smul.addr %s274, 7
          %s285 = smul.addr %s284, 128
          %s286 = scalar_lea.hbm %s0, %s285
          %s287 = smul.u32 56, %s277
          %s288 = sshll.u32 %s273, 4
          %s289 = int_to_ptr.vmem [resolvable:$true] %s288
          %s290 = sshll.u32 %s287, 4
          %294 = dma.hbm_to_vmem [thread:$0]  (%p283), %s286, %s290, %s289, %s270, 896, 896, 56
        $region44: #{tpu_custom_call.1} parent=39 // pred_fallthru
          _
      $region40: #{tpu_custom_call.1} parent=5 // pred_fallthru
        _
      %p295 = scmp.le.s32.totalorder 1, %s21
      %p296 = scmp.lt.s32.totalorder %s21, 4
      %p297 = pnand %p295, %p296
      %p298 = pneg %p297
      // Predicated region
      $region45: #{tpu_custom_call.1} parent=5 // pred_check
        _
      $region46: #{tpu_custom_call.1} parent=5 // pred_check_branch
        %300 = sbr.rel (%p297) target = $region48
      $region47: #{tpu_custom_call.1} parent=5 // pred_region
        %s301 = ssub.s32 %s21, 1
        %s302 = sand.u32 %s34, 1
        %s303 = scalar_lea.sflag [#allocation3], %s302
        %s304 = sand.u32 %s34, 1
        %s305 = smul.addr %s304, 112
        %s306 = scalar_lea.vmem [#allocation2], %s305
        // Predicated region
        $region49: #{tpu_custom_call.1} parent=47 // pred_check
          %p307 = pneg %p47
        $region50: #{tpu_custom_call.1} parent=47 // pred_check_branch
          %309 = sbr.rel (%p307) target = $region52
        $region51: #{tpu_custom_call.1} parent=47 // pred_region
          %310 = dma.done %s303, 1792
        $region52: #{tpu_custom_call.1} parent=47 // pred_fallthru
          _
        // Predicated region
        $region53: #{tpu_custom_call.1} parent=47 // pred_check
          %p311 = pneg %p68
        $region54: #{tpu_custom_call.1} parent=47 // pred_check_branch
          %313 = sbr.rel (%p311) target = $region56
        $region55: #{tpu_custom_call.1} parent=47 // pred_region
          %314 = dma.done [#allocation6], 6272
        $region56: #{tpu_custom_call.1} parent=47 // pred_fallthru
          _
        // Predicated region
        $region57: #{tpu_custom_call.1} parent=47 // pred_check
          %p315 = pneg %p110
        $region58: #{tpu_custom_call.1} parent=47 // pred_check_branch
          %317 = sbr.rel (%p315) target = $region60
        $region59: #{tpu_custom_call.1} parent=47 // pred_region
          %318 = dma.done [#allocation6], 1024
        $region60: #{tpu_custom_call.1} parent=47 // pred_fallthru
          _
        // Predicated region
        $region61: #{tpu_custom_call.1} parent=47 // pred_check
          %p319 = pneg %p152
        $region62: #{tpu_custom_call.1} parent=47 // pred_check_branch
          %321 = sbr.rel (%p319) target = $region64
        $region63: #{tpu_custom_call.1} parent=47 // pred_region
          %322 = dma.done [#allocation9], 1024
        $region64: #{tpu_custom_call.1} parent=47 // pred_fallthru
          _
        %s323 = sand.u32 %s34, 1
        %s324 = scalar_lea.sflag [#allocation3], %s323
        %s325 = sand.u32 %s34, 1
        %s326 = smul.addr %s325, 112
        %s327 = scalar_lea.vmem [#allocation2], %s326
        %p328 = pneg %p47
        %p329 = pneg %p44
        %p330 = pneg %p68
        %p331 = pneg %p65
        %p332 = pneg %p89
        %p333 = pneg %p86
        %p334 = pneg %p110
        %p335 = pneg %p107
        %p336 = pneg %p131
        %p337 = pneg %p128
        %p338 = pneg %p152
        %p339 = pneg %p149
        %p340 = pneg %p173
        %p341 = pneg %p170
        %p342 = pneg %p199
        %p343 = pneg %p196
        %s344 = sand.u32 %s186, 1
        %s345 = scalar_lea.sflag [#allocation4], %s344
        %s346 = sand.u32 %s186, 1
        %s347 = smul.addr %s346, 16
        %s348 = scalar_lea.vmem [#allocation10], %s347
        %s349 = smul.u32 2, %s26
        %s350 = ssub.s32 5, %s349
        %p351 = scmp.lt.s32.totalorder %s350, 2
        %s352 = scalar_select %p351, %s350, 2
        %s353 = smul.u32 128, %s352
        %s354 = smul.u32 %s353, 7
        %s355 = smul.u32 2, %s26
        %s356 = ssub.s32 5, %s355
        %p357 = scmp.lt.s32.totalorder %s356, 2
        %s358 = scalar_select %p357, %s356, 2
        %s359 = smul.u32 128, %s358
        %v361 = vld [vmem:[%s306] sm:$0xff]
        %v362 = vld [vmem:[%s306 + $0x8] sm:$0xff]
        %v363 = vld [vmem:[%s306 + $0x10] sm:$0xff]
        %v364 = vld [vmem:[%s306 + $0x18] sm:$0xff]
        %v365 = vld [vmem:[%s306 + $0x20] sm:$0xff]
        %v366 = vld [vmem:[%s306 + $0x28] sm:$0xff]
        %v367 = vld [vmem:[%s306 + $0x30] sm:$0xff]
        %v368 = vld [vmem:[%s306 + $0x38] sm:$0xff]
        %v369 = vld [vmem:[%s306 + $0x40] sm:$0xff]
        %v370 = vld [vmem:[%s306 + $0x48] sm:$0xff]
        %v371 = vld [vmem:[%s306 + $0x50] sm:$0xff]
        %v372 = vld [vmem:[%s306 + $0x58] sm:$0xff]
        %v373 = vld [vmem:[%s306 + $0x60] sm:$0xff]
        %v374 = vld [vmem:[%s306 + $0x68] sm:$0xff]
        %v375 = vpack.c.bf16 %v368, %v361
        %v376 = vpack.c.bf16 %v369, %v362
        %v377 = vpack.c.bf16 %v370, %v363
        %v378 = vpack.c.bf16 %v371, %v364
        %v379 = vpack.c.bf16 %v372, %v365
        %v380 = vpack.c.bf16 %v373, %v366
        %v381 = vpack.c.bf16 %v374, %v367
        %v382 = vld [vmem:[#allocation5] sm:$0xf]
        %v383 = vld [vmem:[#allocation5 + $0x4] sm:$0xf]
        %v384 = vld [vmem:[#allocation5 + $0x8] sm:$0xf]
        %v385 = vld [vmem:[#allocation5 + $0xc] sm:$0xf]
        %v386 = vld [vmem:[#allocation5 + $0x10] sm:$0xf]
        %v387 = vld [vmem:[#allocation5 + $0x14] sm:$0xf]
        %v388 = vld [vmem:[#allocation5 + $0x18] sm:$0xf]
        %v389 = vld [vmem:[#allocation5 + $0x1c] sm:$0xf]
        %v390 = vld [vmem:[#allocation5 + $0x20] sm:$0xf]
        %v391 = vld [vmem:[#allocation5 + $0x24] sm:$0xf]
        %v392 = vld [vmem:[#allocation5 + $0x28] sm:$0xf]
        %v393 = vld [vmem:[#allocation5 + $0x2c] sm:$0xf]
        %v394 = vld [vmem:[#allocation5 + $0x30] sm:$0xf]
        %v395 = vld [vmem:[#allocation5 + $0x34] sm:$0xf]
        %v396 = vld [vmem:[#allocation5 + $0x38] sm:$0xf]
        %v397 = vld [vmem:[#allocation5 + $0x3c] sm:$0xf]
        %v398 = vld [vmem:[#allocation5 + $0x40] sm:$0xf]
        %v399 = vld [vmem:[#allocation5 + $0x44] sm:$0xf]
        %v400 = vld [vmem:[#allocation5 + $0x48] sm:$0xf]
        %v401 = vld [vmem:[#allocation5 + $0x4c] sm:$0xf]
        %v402 = vld [vmem:[#allocation5 + $0x50] sm:$0xf]
        %v403 = vld [vmem:[#allocation5 + $0x54] sm:$0xf]
        %v404 = vld [vmem:[#allocation5 + $0x58] sm:$0xf]
        %v405 = vld [vmem:[#allocation5 + $0x5c] sm:$0xf]
        %v406 = vld [vmem:[#allocation5 + $0x60] sm:$0xf]
        %v407 = vld [vmem:[#allocation5 + $0x64] sm:$0xf]
        %v408 = vld [vmem:[#allocation5 + $0x68] sm:$0xf]
        %v409 = vld [vmem:[#allocation5 + $0x6c] sm:$0xf]
        %v410 = vld [vmem:[#allocation5 + $0x70] sm:$0xf]
        %v411 = vld [vmem:[#allocation5 + $0x74] sm:$0xf]
        %v412 = vld [vmem:[#allocation5 + $0x78] sm:$0xf]
        %v413 = vld [vmem:[#allocation5 + $0x7c] sm:$0xf]
        %v414 = vld [vmem:[#allocation5 + $0x80] sm:$0xf]
        %v415 = vld [vmem:[#allocation5 + $0x84] sm:$0xf]
        %v416 = vld [vmem:[#allocation5 + $0x88] sm:$0xf]
        %v417 = vld [vmem:[#allocation5 + $0x8c] sm:$0xf]
        %v418 = vld [vmem:[#allocation5 + $0x90] sm:$0xf]
        %v419 = vld [vmem:[#allocation5 + $0x94] sm:$0xf]
        %v420 = vld [vmem:[#allocation5 + $0x98] sm:$0xf]
        %v421 = vld [vmem:[#allocation5 + $0x9c] sm:$0xf]
        %v422 = vld [vmem:[#allocation5 + $0xa0] sm:$0xf]
        %v423 = vld [vmem:[#allocation5 + $0xa4] sm:$0xf]
        %v424 = vld [vmem:[#allocation5 + $0xa8] sm:$0xf]
        %v425 = vld [vmem:[#allocation5 + $0xac] sm:$0xf]
        %v426 = vld [vmem:[#allocation5 + $0xb0] sm:$0xf]
        %v427 = vld [vmem:[#allocation5 + $0xb4] sm:$0xf]
        %v428 = vld [vmem:[#allocation5 + $0xb8] sm:$0xf]
        %v429 = vld [vmem:[#allocation5 + $0xbc] sm:$0xf]
        %v430 = vld [vmem:[#allocation5 + $0xc0] sm:$0xf]
        %v431 = vld [vmem:[#allocation5 + $0xc4] sm:$0xf]
        %v432 = vld [vmem:[#allocation5 + $0xc8] sm:$0xf]
        %v433 = vld [vmem:[#allocation5 + $0xcc] sm:$0xf]
        %v434 = vld [vmem:[#allocation5 + $0xd0] sm:$0xf]
        %v435 = vld [vmem:[#allocation5 + $0xd4] sm:$0xf]
        %v436 = vld [vmem:[#allocation5 + $0xd8] sm:$0xf]
        %v437 = vld [vmem:[#allocation5 + $0xdc] sm:$0xf]
        %v438 = vld [vmem:[#allocation5 + $0xe0] sm:$0xf]
        %v439 = vld [vmem:[#allocation5 + $0xe4] sm:$0xf]
        %v440 = vld [vmem:[#allocation5 + $0xe8] sm:$0xf]
        %v441 = vld [vmem:[#allocation5 + $0xec] sm:$0xf]
        %v442 = vld [vmem:[#allocation5 + $0xf0] sm:$0xf]
        %v443 = vld [vmem:[#allocation5 + $0xf4] sm:$0xf]
        %v444 = vld [vmem:[#allocation5 + $0xf8] sm:$0xf]
        %v445 = vld [vmem:[#allocation5 + $0xfc] sm:$0xf]
        %v446 = vld [vmem:[#allocation5 + $0x100] sm:$0xf]
        %v447 = vld [vmem:[#allocation5 + $0x104] sm:$0xf]
        %v448 = vld [vmem:[#allocation5 + $0x108] sm:$0xf]
        %v449 = vld [vmem:[#allocation5 + $0x10c] sm:$0xf]
        %v450 = vld [vmem:[#allocation5 + $0x110] sm:$0xf]
        %v451 = vld [vmem:[#allocation5 + $0x114] sm:$0xf]
        %v452 = vld [vmem:[#allocation5 + $0x118] sm:$0xf]
        %v453 = vld [vmem:[#allocation5 + $0x11c] sm:$0xf]
        %v454 = vld [vmem:[#allocation5 + $0x120] sm:$0xf]
        %v455 = vld [vmem:[#allocation5 + $0x124] sm:$0xf]
        %v456 = vld [vmem:[#allocation5 + $0x128] sm:$0xf]
        %v457 = vld [vmem:[#allocation5 + $0x12c] sm:$0xf]
        %v458 = vld [vmem:[#allocation5 + $0x130] sm:$0xf]
        %v459 = vld [vmem:[#allocation5 + $0x134] sm:$0xf]
        %v460 = vld [vmem:[#allocation5 + $0x138] sm:$0xf]
        %v461 = vld [vmem:[#allocation5 + $0x13c] sm:$0xf]
        %v462 = vld [vmem:[#allocation5 + $0x140] sm:$0xf]
        %v463 = vld [vmem:[#allocation5 + $0x144] sm:$0xf]
        %v464 = vld [vmem:[#allocation5 + $0x148] sm:$0xf]
        %v465 = vld [vmem:[#allocation5 + $0x14c] sm:$0xf]
        %v466 = vld [vmem:[#allocation5 + $0x150] sm:$0xf]
        %v467 = vld [vmem:[#allocation5 + $0x154] sm:$0xf]
        %v468 = vld [vmem:[#allocation5 + $0x158] sm:$0xf]
        %v469 = vld [vmem:[#allocation5 + $0x15c] sm:$0xf]
        %v470 = vld [vmem:[#allocation5 + $0x160] sm:$0xf]
        %v471 = vld [vmem:[#allocation5 + $0x164] sm:$0xf]
        %v472 = vld [vmem:[#allocation5 + $0x168] sm:$0xf]
        %v473 = vld [vmem:[#allocation5 + $0x16c] sm:$0xf]
        %v474 = vld [vmem:[#allocation5 + $0x170] sm:$0xf]
        %v475 = vld [vmem:[#allocation5 + $0x174] sm:$0xf]
        %v476 = vld [vmem:[#allocation5 + $0x178] sm:$0xf]
        %v477 = vld [vmem:[#allocation5 + $0x17c] sm:$0xf]
        %v478 = vld [vmem:[#allocation5 + $0x180] sm:$0xf]
        %v479 = vld [vmem:[#allocation5 + $0x184] sm:$0xf]
        %v480 = vld [vmem:[%s2] sm:$0x1]
        %v482 = vlaneseq
        %v483 = vshrl.u32 %v482, 7
        %v484 = vsub.s32 0, %v483
        %v485 = vrot.slane %v480, %v484
        %v585 = vunpack.c.l.b16 %v382
        %v586 = vunpack.c.l.b16 %v383
        %v587 = vunpack.c.l.b16 %v384
        %v588 = vunpack.c.l.b16 %v385
        %v589 = vunpack.c.l.b16 %v386
        %v590 = vunpack.c.l.b16 %v387
        %v591 = vunpack.c.l.b16 %v388
        %v592 = vunpack.c.l.b16 %v389
        %v593 = vunpack.c.l.b16 %v390
        %v594 = vunpack.c.l.b16 %v391
        %v595 = vunpack.c.l.b16 %v392
        %v596 = vunpack.c.l.b16 %v393
        %v597 = vunpack.c.l.b16 %v394
        %v598 = vunpack.c.l.b16 %v395
        %v599 = vunpack.c.l.b16 %v396
        %v600 = vunpack.c.l.b16 %v397
        %v601 = vunpack.c.l.b16 %v398
        %v602 = vunpack.c.l.b16 %v399
        %v603 = vunpack.c.l.b16 %v400
        %v604 = vunpack.c.l.b16 %v401
        %v605 = vunpack.c.l.b16 %v402
        %v606 = vunpack.c.l.b16 %v403
        %v607 = vunpack.c.l.b16 %v404
        %v608 = vunpack.c.l.b16 %v405
        %v609 = vunpack.c.l.b16 %v406
        %v610 = vunpack.c.l.b16 %v407
        %v611 = vunpack.c.l.b16 %v408
        %v612 = vunpack.c.l.b16 %v409
        %v613 = vunpack.c.l.b16 %v410
        %v614 = vunpack.c.l.b16 %v411
        %v615 = vunpack.c.l.b16 %v412
        %v616 = vunpack.c.l.b16 %v413
        %v617 = vunpack.c.l.b16 %v414
        %v618 = vunpack.c.l.b16 %v415
        %v619 = vunpack.c.l.b16 %v416
        %v620 = vunpack.c.l.b16 %v417
        %v621 = vunpack.c.l.b16 %v418
        %v622 = vunpack.c.l.b16 %v419
        %v623 = vunpack.c.l.b16 %v420
        %v624 = vunpack.c.l.b16 %v421
        %v625 = vunpack.c.l.b16 %v422
        %v626 = vunpack.c.l.b16 %v423
        %v627 = vunpack.c.l.b16 %v424
        %v628 = vunpack.c.l.b16 %v425
        %v629 = vunpack.c.l.b16 %v426
        %v630 = vunpack.c.l.b16 %v427
        %v631 = vunpack.c.l.b16 %v428
        %v632 = vunpack.c.l.b16 %v429
        %v633 = vunpack.c.l.b16 %v430
        %v634 = vunpack.c.l.b16 %v431
        %v635 = vunpack.c.l.b16 %v432
        %v636 = vunpack.c.l.b16 %v433
        %v637 = vunpack.c.l.b16 %v434
        %v638 = vunpack.c.l.b16 %v435
        %v639 = vunpack.c.l.b16 %v436
        %v640 = vunpack.c.l.b16 %v437
        %v641 = vunpack.c.l.b16 %v438
        %v642 = vunpack.c.l.b16 %v439
        %v643 = vunpack.c.l.b16 %v440
        %v644 = vunpack.c.l.b16 %v441
        %v645 = vunpack.c.l.b16 %v442
        %v646 = vunpack.c.l.b16 %v443
        %v647 = vunpack.c.l.b16 %v444
        %v648 = vunpack.c.l.b16 %v445
        %v649 = vunpack.c.l.b16 %v446
        %v650 = vunpack.c.l.b16 %v447
        %v651 = vunpack.c.l.b16 %v448
        %v652 = vunpack.c.l.b16 %v449
        %v653 = vunpack.c.l.b16 %v450
        %v654 = vunpack.c.l.b16 %v451
        %v655 = vunpack.c.l.b16 %v452
        %v656 = vunpack.c.l.b16 %v453
        %v657 = vunpack.c.l.b16 %v454
        %v658 = vunpack.c.l.b16 %v455
        %v659 = vunpack.c.l.b16 %v456
        %v660 = vunpack.c.l.b16 %v457
        %v661 = vunpack.c.l.b16 %v458
        %v662 = vunpack.c.l.b16 %v459
        %v663 = vunpack.c.l.b16 %v460
        %v664 = vunpack.c.l.b16 %v461
        %v665 = vunpack.c.l.b16 %v462
        %v666 = vunpack.c.l.b16 %v463
        %v667 = vunpack.c.l.b16 %v464
        %v668 = vunpack.c.l.b16 %v465
        %v669 = vunpack.c.l.b16 %v466
        %v670 = vunpack.c.l.b16 %v467
        %v671 = vunpack.c.l.b16 %v468
        %v672 = vunpack.c.l.b16 %v469
        %v673 = vunpack.c.l.b16 %v470
        %v674 = vunpack.c.l.b16 %v471
        %v675 = vunpack.c.l.b16 %v472
        %v676 = vunpack.c.l.b16 %v473
        %v677 = vunpack.c.l.b16 %v474
        %v678 = vunpack.c.l.b16 %v475
        %v679 = vunpack.c.l.b16 %v476
        %v680 = vunpack.c.l.b16 %v477
        %v681 = vunpack.c.l.b16 %v478
        %v682 = vunpack.c.l.b16 %v479
        %v683 = vpack.c.b16 %v586, %v585
        %v684 = vpack.c.b16 %v588, %v587
        %v685 = vpack.c.b16 %v590, %v589
        %v686 = vpack.c.b16 %v592, %v591
        %v687 = vpack.c.b16 %v594, %v593
        %v688 = vpack.c.b16 %v596, %v595
        %v689 = vpack.c.b16 %v598, %v597
        %v690 = vpack.c.b16 %v600, %v599
        %v691 = vpack.c.b16 %v602, %v601
        %v692 = vpack.c.b16 %v604, %v603
        %v693 = vpack.c.b16 %v606, %v605
        %v694 = vpack.c.b16 %v608, %v607
        %v695 = vpack.c.b16 %v610, %v609
        %v696 = vpack.c.b16 %v612, %v611
        %v697 = vpack.c.b16 %v614, %v613
        %v698 = vpack.c.b16 %v616, %v615
        %v699 = vpack.c.b16 %v618, %v617
        %v700 = vpack.c.b16 %v620, %v619
        %v701 = vpack.c.b16 %v622, %v621
        %v702 = vpack.c.b16 %v624, %v623
        %v703 = vpack.c.b16 %v626, %v625
        %v704 = vpack.c.b16 %v628, %v627
        %v705 = vpack.c.b16 %v630, %v629
        %v706 = vpack.c.b16 %v632, %v631
        %v707 = vpack.c.b16 %v634, %v633
        %v708 = vpack.c.b16 %v636, %v635
        %v709 = vpack.c.b16 %v638, %v637
        %v710 = vpack.c.b16 %v640, %v639
        %v711 = vpack.c.b16 %v642, %v641
        %v712 = vpack.c.b16 %v644, %v643
        %v713 = vpack.c.b16 %v646, %v645
        %v714 = vpack.c.b16 %v648, %v647
        %v715 = vpack.c.b16 %v650, %v649
        %v716 = vpack.c.b16 %v652, %v651
        %v717 = vpack.c.b16 %v654, %v653
        %v718 = vpack.c.b16 %v656, %v655
        %v719 = vpack.c.b16 %v658, %v657
        %v720 = vpack.c.b16 %v660, %v659
        %v721 = vpack.c.b16 %v662, %v661
        %v722 = vpack.c.b16 %v664, %v663
        %v723 = vpack.c.b16 %v666, %v665
        %v724 = vpack.c.b16 %v668, %v667
        %v725 = vpack.c.b16 %v670, %v669
        %v726 = vpack.c.b16 %v672, %v671
        %v727 = vpack.c.b16 %v674, %v673
        %v728 = vpack.c.b16 %v676, %v675
        %v729 = vpack.c.b16 %v678, %v677
        %v730 = vpack.c.b16 %v680, %v679
        %v731 = vpack.c.b16 %v682, %v681
        %vm781 = vcmask 130048
        %v783 = vsel %vm781, %v381, 0
        %785 = vmatprep.subr.bf16.mxu0 0
        %786 = vmatpush1.bf16.msra.mxu0 %v690
        %787 = vmatprep.subr.bf16.mxu0 0
        %788 = vmatpush1.bf16.msra.mxu0 %v689
        %789 = vmatprep.subr.bf16.mxu0 0
        %790 = vmatpush1.bf16.msra.mxu0 %v688
        %791 = vmatprep.subr.bf16.mxu0 0
        %792 = vmatpush1.bf16.msra.mxu0 %v687
        %793 = vmatprep.subr.bf16.mxu0 0
        %794 = vmatpush1.bf16.msra.mxu0 %v686
        %795 = vmatprep.subr.bf16.mxu0 0
        %796 = vmatpush1.bf16.msra.mxu0 %v685
        %797 = vmatprep.subr.bf16.mxu0 0
        %798 = vmatpush1.bf16.msra.mxu0 %v684
        %799 = vmatprep.subr.bf16.mxu0 0
        %800 = vmatpush1.bf16.msra.mxu0 %v683
        %801 = vmatprep.subr.bf16.mxu0 0
        %802 = vmatpush2.bf16.msra.mxu0 %v698
        %803 = vmatprep.subr.bf16.mxu0 0
        %804 = vmatpush2.bf16.msra.mxu0 %v697
        %805 = vmatprep.subr.bf16.mxu0 0
        %806 = vmatpush2.bf16.msra.mxu0 %v696
        %807 = vmatprep.subr.bf16.mxu0 0
        %808 = vmatpush2.bf16.msra.mxu0 %v695
        %809 = vmatprep.subr.bf16.mxu0 0
        %810 = vmatpush2.bf16.msra.mxu0 %v694
        %811 = vmatprep.subr.bf16.mxu0 0
        %812 = vmatpush2.bf16.msra.mxu0 %v693
        %813 = vmatprep.subr.bf16.mxu0 0
        %814 = vmatpush2.bf16.msra.mxu0 %v692
        %815 = vmatprep.subr.bf16.mxu0 0
        %816 = vmatpush2.bf16.msra.mxu0 %v691
        %817 = vmatprep.mubr.bf16.mxu0 %v376
        %818 = vmatmul.mubr.bf16.gmra.mxu0 %v375
        %v819 = vpop.f32.mrf.mxu0
        %v820 = vadd.f32 %v485, %v819
        %v821 = vpop.f32.mrf.mxu0
        %v822 = vpop.f32.mrf.mxu0
        %v823 = vadd.f32 %v485, %v822
        %v824 = vpop.f32.mrf.mxu0
        %825 = vdwg.mxu0
        %826 = vmatprep.subr.bf16.mxu0 0
        %827 = vmatpush1.bf16.msra.mxu0 %v706
        %828 = vmatprep.subr.bf16.mxu0 0
        %829 = vmatpush1.bf16.msra.mxu0 %v705
        %830 = vmatprep.subr.bf16.mxu0 0
        %831 = vmatpush1.bf16.msra.mxu0 %v704
        %832 = vmatprep.subr.bf16.mxu0 0
        %833 = vmatpush1.bf16.msra.mxu0 %v703
        %834 = vmatprep.subr.bf16.mxu0 0
        %835 = vmatpush1.bf16.msra.mxu0 %v702
        %836 = vmatprep.subr.bf16.mxu0 0
        %837 = vmatpush1.bf16.msra.mxu0 %v701
        %838 = vmatprep.subr.bf16.mxu0 0
        %839 = vmatpush1.bf16.msra.mxu0 %v700
        %840 = vmatprep.subr.bf16.mxu0 0
        %841 = vmatpush1.bf16.msra.mxu0 %v699
        %842 = vmatprep.subr.bf16.mxu0 0
        %843 = vmatpush2.bf16.msra.mxu0 %v714
        %844 = vmatprep.subr.bf16.mxu0 0
        %845 = vmatpush2.bf16.msra.mxu0 %v713
        %846 = vmatprep.subr.bf16.mxu0 0
        %847 = vmatpush2.bf16.msra.mxu0 %v712
        %848 = vmatprep.subr.bf16.mxu0 0
        %849 = vmatpush2.bf16.msra.mxu0 %v711
        %850 = vmatprep.subr.bf16.mxu0 0
        %851 = vmatpush2.bf16.msra.mxu0 %v710
        %852 = vmatprep.subr.bf16.mxu0 0
        %853 = vmatpush2.bf16.msra.mxu0 %v709
        %854 = vmatprep.subr.bf16.mxu0 0
        %855 = vmatpush2.bf16.msra.mxu0 %v708
        %856 = vmatprep.subr.bf16.mxu0 0
        %857 = vmatpush2.bf16.msra.mxu0 %v707
        %858 = vmatprep.mubr.bf16.mxu0 %v378
        %859 = vmatmul.mubr.bf16.gmra.mxu0 %v377
        %v860 = vpop.f32.mrf.mxu0
        %v861 = vadd.f32 %v820, %v860
        %v862 = vpop.f32.mrf.mxu0
        %v863 = vpop.f32.mrf.mxu0
        %v864 = vadd.f32 %v823, %v863
        %v865 = vpop.f32.mrf.mxu0
        %866 = vdwg.mxu0
        %867 = vmatprep.subr.bf16.mxu0 0
        %868 = vmatpush1.bf16.msra.mxu0 %v722
        %869 = vmatprep.subr.bf16.mxu0 0
        %870 = vmatpush1.bf16.msra.mxu0 %v721
        %871 = vmatprep.subr.bf16.mxu0 0
        %872 = vmatpush1.bf16.msra.mxu0 %v720
        %873 = vmatprep.subr.bf16.mxu0 0
        %874 = vmatpush1.bf16.msra.mxu0 %v719
        %875 = vmatprep.subr.bf16.mxu0 0
        %876 = vmatpush1.bf16.msra.mxu0 %v718
        %877 = vmatprep.subr.bf16.mxu0 0
        %878 = vmatpush1.bf16.msra.mxu0 %v717
        %879 = vmatprep.subr.bf16.mxu0 0
        %880 = vmatpush1.bf16.msra.mxu0 %v716
        %881 = vmatprep.subr.bf16.mxu0 0
        %882 = vmatpush1.bf16.msra.mxu0 %v715
        %883 = vmatprep.subr.bf16.mxu0 0
        %884 = vmatpush2.bf16.msra.mxu0 %v730
        %885 = vmatprep.subr.bf16.mxu0 0
        %886 = vmatpush2.bf16.msra.mxu0 %v729
        %887 = vmatprep.subr.bf16.mxu0 0
        %888 = vmatpush2.bf16.msra.mxu0 %v728
        %889 = vmatprep.subr.bf16.mxu0 0
        %890 = vmatpush2.bf16.msra.mxu0 %v727
        %891 = vmatprep.subr.bf16.mxu0 0
        %892 = vmatpush2.bf16.msra.mxu0 %v726
        %893 = vmatprep.subr.bf16.mxu0 0
        %894 = vmatpush2.bf16.msra.mxu0 %v725
        %895 = vmatprep.subr.bf16.mxu0 0
        %896 = vmatpush2.bf16.msra.mxu0 %v724
        %897 = vmatprep.subr.bf16.mxu0 0
        %898 = vmatpush2.bf16.msra.mxu0 %v723
        %899 = vmatprep.mubr.bf16.mxu0 %v380
        %900 = vmatmul.mubr.bf16.gmra.mxu0 %v379
        %v901 = vpop.f32.mrf.mxu0
        %v902 = vadd.f32 %v861, %v901
        %v903 = vpop.f32.mrf.mxu0
        %v904 = vpop.f32.mrf.mxu0
        %v905 = vadd.f32 %v864, %v904
        %v906 = vpop.f32.mrf.mxu0
        %907 = vdwg.mxu0
        %908 = vmatprep.subr.bf16.mxu0 0
        %909 = vmatpush1.bf16.msra.mxu0 0
        %910 = vmatprep.subr.bf16.mxu0 0
        %911 = vmatpush1.bf16.msra.mxu0 0
        %912 = vmatprep.subr.bf16.mxu0 0
        %913 = vmatpush1.bf16.msra.mxu0 0
        %914 = vmatprep.subr.bf16.mxu0 0
        %915 = vmatpush1.bf16.msra.mxu0 0
        %916 = vmatprep.subr.bf16.mxu0 0
        %917 = vmatpush1.bf16.msra.mxu0 0
        %918 = vmatprep.subr.bf16.mxu0 0
        %919 = vmatpush1.bf16.msra.mxu0 0
        %920 = vmatprep.subr.bf16.mxu0 0
        %921 = vmatpush1.bf16.msra.mxu0 0
        %922 = vmatprep.subr.bf16.mxu0 0
        %923 = vmatpush1.bf16.msra.mxu0 %v731
        %924 = vmatprep.subr.bf16.mxu0 0
        %925 = vmatpush2.bf16.msra.mxu0 0
        %926 = vmatprep.subr.bf16.mxu0 0
        %927 = vmatpush2.bf16.msra.mxu0 0
        %928 = vmatprep.subr.bf16.mxu0 0
        %929 = vmatpush2.bf16.msra.mxu0 0
        %930 = vmatprep.subr.bf16.mxu0 0
        %931 = vmatpush2.bf16.msra.mxu0 0
        %932 = vmatprep.subr.bf16.mxu0 0
        %933 = vmatpush2.bf16.msra.mxu0 0
        %934 = vmatprep.subr.bf16.mxu0 0
        %935 = vmatpush2.bf16.msra.mxu0 0
        %936 = vmatprep.subr.bf16.mxu0 0
        %937 = vmatpush2.bf16.msra.mxu0 0
        %938 = vmatprep.subr.bf16.mxu0 0
        %939 = vmatpush2.bf16.msra.mxu0 0
        %940 = vmatprep.mubr.bf16.mxu0 0
        %941 = vmatmul.mubr.bf16.gmra.mxu0 %v783
        %v942 = vpop.f32.mrf.mxu0
        %v943 = vadd.f32 %v902, %v942
        %v944 = vpop.f32.mrf.mxu0
        %v945 = vpop.f32.mrf.mxu0
        %v946 = vadd.f32 %v905, %v945
        %v947 = vpop.f32.mrf.mxu0
        %948 = vdwg.mxu0
        %v949 = vmax.f32 %v943, 0.0
        %v950 = vmax.f32 %v946, 0.0
        %v951 = vpack.c.bf16 %v950, %v949
        %v952 = vld [vmem:[#allocation7] sm:$0xf]
        %v953 = vld [vmem:[#allocation7 + $0x4] sm:$0xf]
        %v954 = vld [vmem:[#allocation7 + $0x8] sm:$0xf]
        %v955 = vld [vmem:[#allocation7 + $0xc] sm:$0xf]
        %v956 = vld [vmem:[#allocation7 + $0x10] sm:$0xf]
        %v957 = vld [vmem:[#allocation7 + $0x14] sm:$0xf]
        %v958 = vld [vmem:[#allocation7 + $0x18] sm:$0xf]
        %v959 = vld [vmem:[#allocation7 + $0x1c] sm:$0xf]
        %v960 = vld [vmem:[#allocation7 + $0x20] sm:$0xf]
        %v961 = vld [vmem:[#allocation7 + $0x24] sm:$0xf]
        %v962 = vld [vmem:[#allocation7 + $0x28] sm:$0xf]
        %v963 = vld [vmem:[#allocation7 + $0x2c] sm:$0xf]
        %v964 = vld [vmem:[#allocation7 + $0x30] sm:$0xf]
        %v965 = vld [vmem:[#allocation7 + $0x34] sm:$0xf]
        %v966 = vld [vmem:[#allocation7 + $0x38] sm:$0xf]
        %v967 = vld [vmem:[#allocation7 + $0x3c] sm:$0xf]
        %v968 = vld [vmem:[%s4] sm:$0x1]
        %v970 = vlaneseq
        %v971 = vshrl.u32 %v970, 7
        %v972 = vsub.s32 0, %v971
        %v973 = vrot.slane %v968, %v972
        %v991 = vunpack.c.l.b16 %v952
        %v992 = vunpack.c.l.b16 %v953
        %v993 = vunpack.c.l.b16 %v954
        %v994 = vunpack.c.l.b16 %v955
        %v995 = vunpack.c.l.b16 %v956
        %v996 = vunpack.c.l.b16 %v957
        %v997 = vunpack.c.l.b16 %v958
        %v998 = vunpack.c.l.b16 %v959
        %v999 = vunpack.c.l.b16 %v960
        %v1000 = vunpack.c.l.b16 %v961
        %v1001 = vunpack.c.l.b16 %v962
        %v1002 = vunpack.c.l.b16 %v963
        %v1003 = vunpack.c.l.b16 %v964
        %v1004 = vunpack.c.l.b16 %v965
        %v1005 = vunpack.c.l.b16 %v966
        %v1006 = vunpack.c.l.b16 %v967
        %v1007 = vpack.c.b16 %v992, %v991
        %v1008 = vpack.c.b16 %v994, %v993
        %v1009 = vpack.c.b16 %v996, %v995
        %v1010 = vpack.c.b16 %v998, %v997
        %v1011 = vpack.c.b16 %v1000, %v999
        %v1012 = vpack.c.b16 %v1002, %v1001
        %v1013 = vpack.c.b16 %v1004, %v1003
        %v1014 = vpack.c.b16 %v1006, %v1005
        %1023 = vmatprep.subr.bf16.mxu0 0
        %1024 = vmatpush1.bf16.msra.mxu0 %v1014
        %1025 = vmatprep.subr.bf16.mxu0 0
        %1026 = vmatpush1.bf16.msra.mxu0 %v1013
        %1027 = vmatprep.subr.bf16.mxu0 0
        %1028 = vmatpush1.bf16.msra.mxu0 %v1012
        %1029 = vmatprep.subr.bf16.mxu0 0
        %1030 = vmatpush1.bf16.msra.mxu0 %v1011
        %1031 = vmatprep.subr.bf16.mxu0 0
        %1032 = vmatpush1.bf16.msra.mxu0 %v1010
        %1033 = vmatprep.subr.bf16.mxu0 0
        %1034 = vmatpush1.bf16.msra.mxu0 %v1009
        %1035 = vmatprep.subr.bf16.mxu0 0
        %1036 = vmatpush1.bf16.msra.mxu0 %v1008
        %1037 = vmatprep.subr.bf16.mxu0 0
        %1038 = vmatpush1.bf16.msra.mxu0 %v1007
        %1039 = vmatprep.subr.bf16.mxu0 0
        %1040 = vmatpush2.bf16.msra.mxu0 0
        %1041 = vmatprep.subr.bf16.mxu0 0
        %1042 = vmatpush2.bf16.msra.mxu0 0
        %1043 = vmatprep.subr.bf16.mxu0 0
        %1044 = vmatpush2.bf16.msra.mxu0 0
        %1045 = vmatprep.subr.bf16.mxu0 0
        %1046 = vmatpush2.bf16.msra.mxu0 0
        %1047 = vmatprep.subr.bf16.mxu0 0
        %1048 = vmatpush2.bf16.msra.mxu0 0
        %1049 = vmatprep.subr.bf16.mxu0 0
        %1050 = vmatpush2.bf16.msra.mxu0 0
        %1051 = vmatprep.subr.bf16.mxu0 0
        %1052 = vmatpush2.bf16.msra.mxu0 0
        %1053 = vmatprep.subr.bf16.mxu0 0
        %1054 = vmatpush2.bf16.msra.mxu0 0
        %1055 = vmatprep.mubr.bf16.mxu0 0
        %1056 = vmatmul.mubr.bf16.gmra.mxu0 %v951
        %v1057 = vpop.f32.mrf.mxu0
        %v1058 = vadd.f32 %v973, %v1057
        %v1059 = vpop.f32.mrf.mxu0
        %v1060 = vpop.f32.mrf.mxu0
        %v1061 = vadd.f32 %v973, %v1060
        %v1062 = vpop.f32.mrf.mxu0
        %1063 = vdwg.mxu0
        %v1064 = vmax.f32 %v1058, 0.0
        %v1065 = vmax.f32 %v1061, 0.0
        %v1066 = vpack.c.bf16 %v1065, %v1064
        %v1067 = vld [vmem:[#allocation8] sm:$0xf]
        %v1068 = vld [vmem:[#allocation8 + $0x4] sm:$0xf]
        %v1069 = vld [vmem:[#allocation8 + $0x8] sm:$0xf]
        %v1070 = vld [vmem:[#allocation8 + $0xc] sm:$0xf]
        %v1071 = vld [vmem:[#allocation8 + $0x10] sm:$0xf]
        %v1072 = vld [vmem:[#allocation8 + $0x14] sm:$0xf]
        %v1073 = vld [vmem:[#allocation8 + $0x18] sm:$0xf]
        %v1074 = vld [vmem:[#allocation8 + $0x1c] sm:$0xf]
        %v1075 = vld [vmem:[#allocation8 + $0x20] sm:$0xf]
        %v1076 = vld [vmem:[#allocation8 + $0x24] sm:$0xf]
        %v1077 = vld [vmem:[#allocation8 + $0x28] sm:$0xf]
        %v1078 = vld [vmem:[#allocation8 + $0x2c] sm:$0xf]
        %v1079 = vld [vmem:[#allocation8 + $0x30] sm:$0xf]
        %v1080 = vld [vmem:[#allocation8 + $0x34] sm:$0xf]
        %v1081 = vld [vmem:[#allocation8 + $0x38] sm:$0xf]
        %v1082 = vld [vmem:[#allocation8 + $0x3c] sm:$0xf]
        %v1083 = vld [vmem:[%s6] sm:$0x1]
        %v1085 = vlaneseq
        %v1086 = vshrl.u32 %v1085, 7
        %v1087 = vsub.s32 0, %v1086
        %v1088 = vrot.slane %v1083, %v1087
        %v1106 = vunpack.c.l.b16 %v1067
        %v1107 = vunpack.c.l.b16 %v1068
        %v1108 = vunpack.c.l.b16 %v1069
        %v1109 = vunpack.c.l.b16 %v1070
        %v1110 = vunpack.c.l.b16 %v1071
        %v1111 = vunpack.c.l.b16 %v1072
        %v1112 = vunpack.c.l.b16 %v1073
        %v1113 = vunpack.c.l.b16 %v1074
        %v1114 = vunpack.c.l.b16 %v1075
        %v1115 = vunpack.c.l.b16 %v1076
        %v1116 = vunpack.c.l.b16 %v1077
        %v1117 = vunpack.c.l.b16 %v1078
        %v1118 = vunpack.c.l.b16 %v1079
        %v1119 = vunpack.c.l.b16 %v1080
        %v1120 = vunpack.c.l.b16 %v1081
        %v1121 = vunpack.c.l.b16 %v1082
        %v1122 = vpack.c.b16 %v1107, %v1106
        %v1123 = vpack.c.b16 %v1109, %v1108
        %v1124 = vpack.c.b16 %v1111, %v1110
        %v1125 = vpack.c.b16 %v1113, %v1112
        %v1126 = vpack.c.b16 %v1115, %v1114
        %v1127 = vpack.c.b16 %v1117, %v1116
        %v1128 = vpack.c.b16 %v1119, %v1118
        %v1129 = vpack.c.b16 %v1121, %v1120
        %1138 = vmatprep.subr.bf16.mxu0 0
        %1139 = vmatpush1.bf16.msra.mxu0 %v1129
        %1140 = vmatprep.subr.bf16.mxu0 0
        %1141 = vmatpush1.bf16.msra.mxu0 %v1128
        %1142 = vmatprep.subr.bf16.mxu0 0
        %1143 = vmatpush1.bf16.msra.mxu0 %v1127
        %1144 = vmatprep.subr.bf16.mxu0 0
        %1145 = vmatpush1.bf16.msra.mxu0 %v1126
        %1146 = vmatprep.subr.bf16.mxu0 0
        %1147 = vmatpush1.bf16.msra.mxu0 %v1125
        %1148 = vmatprep.subr.bf16.mxu0 0
        %1149 = vmatpush1.bf16.msra.mxu0 %v1124
        %1150 = vmatprep.subr.bf16.mxu0 0
        %1151 = vmatpush1.bf16.msra.mxu0 %v1123
        %1152 = vmatprep.subr.bf16.mxu0 0
        %1153 = vmatpush1.bf16.msra.mxu0 %v1122
        %1154 = vmatprep.subr.bf16.mxu0 0
        %1155 = vmatpush2.bf16.msra.mxu0 0
        %1156 = vmatprep.subr.bf16.mxu0 0
        %1157 = vmatpush2.bf16.msra.mxu0 0
        %1158 = vmatprep.subr.bf16.mxu0 0
        %1159 = vmatpush2.bf16.msra.mxu0 0
        %1160 = vmatprep.subr.bf16.mxu0 0
        %1161 = vmatpush2.bf16.msra.mxu0 0
        %1162 = vmatprep.subr.bf16.mxu0 0
        %1163 = vmatpush2.bf16.msra.mxu0 0
        %1164 = vmatprep.subr.bf16.mxu0 0
        %1165 = vmatpush2.bf16.msra.mxu0 0
        %1166 = vmatprep.subr.bf16.mxu0 0
        %1167 = vmatpush2.bf16.msra.mxu0 0
        %1168 = vmatprep.subr.bf16.mxu0 0
        %1169 = vmatpush2.bf16.msra.mxu0 0
        %1170 = vmatprep.mubr.bf16.mxu0 0
        %1171 = vmatmul.mubr.bf16.gmra.mxu0 %v1066
        %v1172 = vpop.f32.mrf.mxu0
        %v1173 = vadd.f32 %v1088, %v1172
        %v1174 = vpop.f32.mrf.mxu0
        %v1175 = vpop.f32.mrf.mxu0
        %v1176 = vadd.f32 %v1088, %v1175
        %v1177 = vpop.f32.mrf.mxu0
        %1178 = vdwg.mxu0
        %1179 = vmax.xlane.f32.xlu0 %v1173
        %v1180 = vpop.xlane.xlu0 %1179
        %1181 = vmax.xlane.f32.xlu0 %v1176
        %v1182 = vpop.xlane.xlu0 %1181
        %v1183 = vsub.f32 %v1173, %v1180
        %v1184 = vsub.f32 %v1176, %v1182
        %v1185 = vmul.f32 %v1183, 1.442695
        %v1186 = vpow.pop %v1185
        %v1187 = vmul.f32 %v1184, 1.442695
        %v1188 = vpow.pop %v1187
        %1189 = vadd.xlane.f32.xlu0 %v1186
        %v1190 = vpop.xlane.xlu0 %1189
        %1191 = vadd.xlane.f32.xlu0 %v1188
        %v1192 = vpop.xlane.xlu0 %1191
        %v1193 = vlog2.pop %v1190
        %v1194 = vmul.f32 %v1193, 0.6931472
        %v1195 = vlog2.pop %v1192
        %v1196 = vmul.f32 %v1195, 0.6931472
        %v1197 = vsub.f32 %v1183, %v1194
        %v1198 = vsub.f32 %v1184, %v1196
        %1199 = vst [vmem:[%s348] sm:$0xff] %v1197
        %1200 = vst [vmem:[%s348 + $0x8] sm:$0xff] %v1198
        %s1201 = sand.u32 %s186, 1
        %s1202 = scalar_lea.sflag [#allocation4], %s1201
        %s1203 = sand.u32 %s186, 1
        %s1204 = smul.addr %s1203, 16
        %s1205 = scalar_lea.vmem [#allocation10], %s1204
        // Predicated region
        $region65: #{tpu_custom_call.1} parent=47 // pred_check
          %p1206 = pneg %p196
        $region66: #{tpu_custom_call.1} parent=47 // pred_check_branch
          %1208 = sbr.rel (%p1206) target = $region68
        $region67: #{tpu_custom_call.1} parent=47 // pred_region
          %s1209 = smul.u32 2, %s26
          %s1210 = ssub.s32 5, %s1209
          %p1211 = scmp.lt.s32.totalorder %s1210, 2
          %s1212 = scalar_select %p1211, %s1210, 2
          %s1213 = smul.u32 128, %s1212
          %s1215 = ssub.s32 256, %s1213
          %1216 = vsyncadd %s1202, %s1215
          %p1217 = scmp.ne.s32.totalorder 0, %s1213
          %s1218 = smul.addr %s1209, 128
          %s1219 = scalar_lea.hbm %s7, %s1218
          %s1220 = smul.u32 8, %s1212
          %s1221 = sshll.u32 %s1205, 4
          %s1222 = int_to_ptr.vmem [resolvable:$true] %s1221
          %s1223 = sshll.u32 %s1220, 4
          %1227 = dma.vmem_to_hbm [thread:$0]  (%p1217), %s1222, %s1223, %s1219, %s1202, 128, 128, 8
        $region68: #{tpu_custom_call.1} parent=47 // pred_fallthru
          _
      $region48: #{tpu_custom_call.1} parent=5 // pred_fallthru
        _
      %p1228 = scmp.le.s32.totalorder 2, %s21
      // Predicated region
      $region69: #{tpu_custom_call.1} parent=5 // pred_check
        %p1229 = pneg %p1228
      $region70: #{tpu_custom_call.1} parent=5 // pred_check_branch
        %1231 = sbr.rel (%p1229) target = $region72
      $region71: #{tpu_custom_call.1} parent=5 // pred_region
        %s1232 = ssub.s32 %s21, 2
        // Predicated region
        $region73: #{tpu_custom_call.1} parent=71 // pred_check
          %p1233 = pneg %p202
        $region74: #{tpu_custom_call.1} parent=71 // pred_check_branch
          %1235 = sbr.rel (%p1233) target = $region76
        $region75: #{tpu_custom_call.1} parent=71 // pred_region
          %s1236 = sand.u32 %s187, 1
          %s1237 = scalar_lea.sflag [#allocation4], %s1236
          %s1238 = sand.u32 %s187, 1
          %s1239 = smul.addr %s1238, 16
          %s1240 = scalar_lea.vmem [#allocation10], %s1239
          %1241 = dma.done %s1237, 256
        $region76: #{tpu_custom_call.1} parent=71 // pred_fallthru
          _
      $region72: #{tpu_custom_call.1} parent=5 // pred_fallthru
        _
    $region6: #{tpu_custom_call.1} parent=1 // loop_footer
      %s25 = sadd.s32 1, %s21
    $region7: #{tpu_custom_call.1} parent=1 // loop_footer_branch
      %20 = sbr.rel target = $region3
    $region8: #{tpu_custom_call.1} parent=1 // loop_exit
      _
    %1242 = vsyncpa [#allocation3], 1
    %s1243 = scalar_lea.sflag [#allocation3], 1
    %1244 = vsyncpa %s1243, 1
    %1245 = vsyncpa [#allocation6], 1
    %1246 = vsyncpa [#allocation9], 1
    %1247 = vsyncpa [#allocation4], 1
    %s1248 = scalar_lea.sflag [#allocation4], 1
    %1249 = vsyncpa %s1248, 1

</llo_original>
